<compile_context>
chip_gen: v7x
topology: tpu7x:2x2x1
jax: 0.10.0
libtpu: 0.0.40
codegen_flags: <defaults>
</compile_context>

<pallas_src>
import jax
import jax.numpy as jnp
from jax.experimental import pallas as pl
from jax.experimental.pallas import tpu as pltpu

IN_FEATURES = 10 * 25   # 250
HIDDEN = 200
OUT_FEATURES = 25
HIDDEN_PAD = 256        # hidden padded to a lane-friendly 256 (zero pad is inert)

DEFAULT_TB = 2048       # batch tile (amortizes per-step overhead, VMEM-safe on v5e/v7x)


def _round_up(n, m):
    return ((n + m - 1) // m) * m


def tdnn_kernel(x_ref, w1_ref, b1_ref, w2_ref, b2_ref, o_ref):
    # in-kernel f32 -> bf16 cast of the input tile (rides the idle VPU slot)
    xb = x_ref[...].astype(w1_ref.dtype)
    # fc1 (bf16 MXU, f32 accumulate) + bias + ReLU, bf16 downcast fused in
    h = jnp.dot(xb, w1_ref[...], preferred_element_type=jnp.float32)
    h = jnp.maximum(h + b1_ref[...], 0.0).astype(w2_ref.dtype)
    # fc2 (bf16 MXU, f32 accumulate) + bias, direct 25-wide f32 store
    y = jnp.dot(h, w2_ref[...], preferred_element_type=jnp.float32)
    o_ref[...] = (y + b2_ref[...]).astype(o_ref.dtype)


def pad_params(w1, b1, w2, b2):
    """Pad the hidden dim to 256 and cast weights to bf16.

    w1: (250, 200) -> (250, 256) bf16   b1: (1, 200) -> (1, 256) f32
    w2: (200, 25)  -> (256, 25)  bf16   b2: (1, 25)  -> (1, 25)  f32
    Padded columns/rows are exactly zero, so they contribute nothing.
    """
    w1p = jnp.zeros((IN_FEATURES, HIDDEN_PAD), jnp.float32).at[:, :HIDDEN].set(w1)
    b1p = jnp.zeros((1, HIDDEN_PAD), jnp.float32).at[:, :HIDDEN].set(b1)
    w2p = jnp.zeros((HIDDEN_PAD, OUT_FEATURES), jnp.float32).at[:HIDDEN, :].set(w2)
    b2p = b2.astype(jnp.float32)
    return w1p.astype(jnp.bfloat16), b1p, w2p.astype(jnp.bfloat16), b2p


def _pick_tile(B, tb):
    """Pick the batch tile.

    - clamp to the (8-rounded) batch so tiny batches use one small tile,
    - when there is enough work, keep the grid at >=2 steps so the "parallel"
      batch axis can shard across both v7x TensorCores,
    - tile is always a multiple of 8 (sublane constraint).
    """
    b8 = _round_up(B, 8)
    tb = min(tb, b8)
    if b8 >= 1024:                                  # enough rows for two useful tiles
        tb = min(tb, _round_up((b8 + 1) // 2, 8))
    return max(tb, 8)


def tdnn_forward(x, w1p, b1p, w2p, b2p, *, tb=DEFAULT_TB):
    """x: (B, 250) f32. Returns (B, 25) f32."""
    B, F = x.shape
    assert F == IN_FEATURES

    tb = _pick_tile(B, tb)
    grid = (pl.cdiv(B, tb),)

    cost = pl.CostEstimate(
        flops=2 * B * (IN_FEATURES * HIDDEN_PAD + HIDDEN_PAD * OUT_FEATURES),
        transcendentals=0,
        bytes_accessed=(x.size * 4                          # f32 input
                        + (w1p.size + w2p.size) * 2         # bf16 weights (resident)
                        + (b1p.size + b2p.size) * 4         # f32 biases (resident)
                        + B * OUT_FEATURES * 4),            # f32 25-wide output
    )

    return pl.pallas_call(
        tdnn_kernel,
        out_shape=jax.ShapeDtypeStruct((B, OUT_FEATURES), jnp.float32),
        grid=grid,
        in_specs=[
            pl.BlockSpec((tb, IN_FEATURES), lambda i: (i, 0)),           # x tile (f32)
            pl.BlockSpec((IN_FEATURES, HIDDEN_PAD), lambda i: (0, 0)),   # W1 resident
            pl.BlockSpec((1, HIDDEN_PAD), lambda i: (0, 0)),             # b1 resident
            pl.BlockSpec((HIDDEN_PAD, OUT_FEATURES), lambda i: (0, 0)),  # W2 resident
            pl.BlockSpec((1, OUT_FEATURES), lambda i: (0, 0)),           # b2 resident
        ],
        out_specs=pl.BlockSpec((tb, OUT_FEATURES), lambda i: (i, 0)),
        compiler_params=pltpu.CompilerParams(
            dimension_semantics=("parallel",)),
        cost_estimate=cost,
    )(x, w1p, b1p, w2p, b2p)


def init_params(key):
    """Deterministic init mirroring nn.Linear's U(-1/sqrt(fan_in), 1/sqrt(fan_in)).

    Stored as [in, out] (transposed vs. PyTorch's [out, in]) so the kernel uses x @ W.
    """
    k1, k2, k3, k4 = jax.random.split(key, 4)
    bound1 = 1.0 / jnp.sqrt(jnp.float32(IN_FEATURES))
    bound2 = 1.0 / jnp.sqrt(jnp.float32(HIDDEN))
    w1 = jax.random.uniform(k1, (IN_FEATURES, HIDDEN), jnp.float32, -bound1, bound1)
    b1 = jax.random.uniform(k2, (1, HIDDEN), jnp.float32, -bound1, bound1)
    w2 = jax.random.uniform(k3, (HIDDEN, OUT_FEATURES), jnp.float32, -bound2, bound2)
    b2 = jax.random.uniform(k4, (1, OUT_FEATURES), jnp.float32, -bound2, bound2)
    return w1, b1, w2, b2


def _ref_f32(x, w1, b1, w2, b2):
    return jnp.maximum(x @ w1 + b1, 0.0) @ w2 + b2


def _ref_bf16(x, w1, b1, w2, b2):
    h = jnp.maximum(
        jnp.dot(x.astype(jnp.bfloat16), w1.astype(jnp.bfloat16),
                preferred_element_type=jnp.float32) + b1, 0.0)
    return jnp.dot(h.astype(jnp.bfloat16), w2.astype(jnp.bfloat16),
                   preferred_element_type=jnp.float32) + b2


if __name__ == "__main__":
    key = jax.random.PRNGKey(0)
    kx, kp, kx2 = jax.random.split(key, 3)
    w1, b1, w2, b2 = init_params(kp)
    w1p, b1p, w2p, b2p = pad_params(w1, b1, w2, b2)

    # small batch (single ragged tile: block 8 rows over a 4-row array)
    batch = 4
    x = jax.random.normal(kx, (batch, IN_FEATURES), jnp.float32)
    out = jax.block_until_ready(tdnn_forward(x, w1p, b1p, w2p, b2p))
    assert out.shape == (batch, OUT_FEATURES)
    assert jnp.allclose(out, _ref_f32(x, w1, b1, w2, b2), atol=5e-2, rtol=5e-2)
    assert jnp.allclose(out, _ref_bf16(x, w1, b1, w2, b2), atol=1e-3, rtol=1e-3)

    # multi-tile + ragged last tile path (grid of 4 with a partial final block)
    batch2 = 100
    x2 = jax.random.normal(kx2, (batch2, IN_FEATURES), jnp.float32)
    out2 = jax.block_until_ready(tdnn_forward(x2, w1p, b1p, w2p, b2p, tb=32))
    assert out2.shape == (batch2, OUT_FEATURES)
    assert jnp.allclose(out2, _ref_f32(x2, w1, b1, w2, b2), atol=5e-2, rtol=5e-2)
    assert jnp.allclose(out2, _ref_bf16(x2, w1, b1, w2, b2), atol=1e-3, rtol=1e-3)

    print("KERNEL_OK")
</pallas_src>

<mosaic_0001>
module attributes {stable_mosaic.version = 11 : i64} {
  func.func @tdnn_kernel(%arg0: i32, %arg1: memref<8x250xf32, #tpu.memory_space<vmem>>, %arg2: memref<250x256xbf16, #tpu.memory_space<vmem>>, %arg3: memref<1x256xf32, #tpu.memory_space<vmem>>, %arg4: memref<256x25xbf16, #tpu.memory_space<vmem>>, %arg5: memref<1x25xf32, #tpu.memory_space<vmem>>, %arg6: memref<8x25xf32, #tpu.memory_space<vmem>>) attributes {dimension_semantics = [#tpu.dimension_semantics<parallel>], iteration_bounds = array<i64: 1>, scalar_prefetch = 0 : i64, scratch_operands = 0 : i64, tpu.core_type = #tpu.core_type<tc>, window_params = [{transform_indices = @transform_0, window_bounds = array<i64: 8, 250>}, {pipeline_mode = #tpu.pipeline_mode<synchronous>, transform_indices = @transform_1, window_bounds = array<i64: 250, 256>}, {pipeline_mode = #tpu.pipeline_mode<synchronous>, transform_indices = @transform_2, window_bounds = array<i64: 1, 256>}, {pipeline_mode = #tpu.pipeline_mode<synchronous>, transform_indices = @transform_3, window_bounds = array<i64: 256, 25>}, {pipeline_mode = #tpu.pipeline_mode<synchronous>, transform_indices = @transform_4, window_bounds = array<i64: 1, 25>}, {transform_indices = @transform_5, window_bounds = array<i64: 8, 25>}]} {
    %c0 = arith.constant 0 : index
    %c0_0 = arith.constant 0 : index
    %0 = vector.load %arg1[%c0, %c0_0] : memref<8x250xf32, #tpu.memory_space<vmem>>, vector<8x250xf32>
    %1 = arith.truncf %0 : vector<8x250xf32> to vector<8x250xbf16>
    %c0_1 = arith.constant 0 : index
    %c0_2 = arith.constant 0 : index
    %2 = vector.load %arg2[%c0_1, %c0_2] : memref<250x256xbf16, #tpu.memory_space<vmem>>, vector<250x256xbf16>
    %cst = arith.constant dense<0.000000e+00> : vector<8x256xf32>
    %3 = tpu.matmul %1, %2, %cst {dimension_numbers = #tpu.dot_dimension_numbers<[1], [0], [0], [1], [0, 0, 1, 1], [], []>} : vector<8x250xbf16>, vector<250x256xbf16>, vector<8x256xf32> -> vector<8x256xf32>
    %c0_3 = arith.constant 0 : index
    %c0_4 = arith.constant 0 : index
    %4 = vector.load %arg3[%c0_3, %c0_4] : memref<1x256xf32, #tpu.memory_space<vmem>>, vector<1x256xf32>
    %5 = vector.broadcast %4 : vector<1x256xf32> to vector<8x256xf32>
    %6 = arith.addf %3, %5 : vector<8x256xf32>
    %cst_5 = arith.constant 0.000000e+00 : f32
    %7 = vector.broadcast %cst_5 : f32 to vector<8x256xf32>
    %8 = arith.maximumf %6, %7 : vector<8x256xf32>
    %9 = arith.truncf %8 : vector<8x256xf32> to vector<8x256xbf16>
    %c0_6 = arith.constant 0 : index
    %c0_7 = arith.constant 0 : index
    %10 = vector.load %arg4[%c0_6, %c0_7] : memref<256x25xbf16, #tpu.memory_space<vmem>>, vector<256x25xbf16>
    %cst_8 = arith.constant dense<0.000000e+00> : vector<8x25xf32>
    %11 = tpu.matmul %9, %10, %cst_8 {dimension_numbers = #tpu.dot_dimension_numbers<[1], [0], [0], [1], [0, 0, 1, 1], [], []>} : vector<8x256xbf16>, vector<256x25xbf16>, vector<8x25xf32> -> vector<8x25xf32>
    %c0_9 = arith.constant 0 : index
    %c0_10 = arith.constant 0 : index
    %12 = vector.load %arg5[%c0_9, %c0_10] : memref<1x25xf32, #tpu.memory_space<vmem>>, vector<1x25xf32>
    %13 = vector.broadcast %12 : vector<1x25xf32> to vector<8x25xf32>
    %14 = arith.addf %11, %13 : vector<8x25xf32>
    %c0_11 = arith.constant 0 : index
    %c0_12 = arith.constant 0 : index
    %15 = vector.load %arg6[%c0_11, %c0_12] : memref<8x25xf32, #tpu.memory_space<vmem>>, vector<8x25xf32>
    tpu.vector_store %arg6[%c0_11, %c0_12], %14 {strides = array<i32>} : memref<8x25xf32, #tpu.memory_space<vmem>>, vector<8x25xf32>,
    return
  }
  func.func @transform_0(%arg0: i32) -> (i32, i32) {
    %c0_i32 = arith.constant 0 : i32
    %c0_i32_0 = arith.constant 0 : i32
    return %arg0, %c0_i32 : i32, i32
  }
  func.func @transform_1(%arg0: i32) -> (i32, i32) {
    %c0_i32 = arith.constant 0 : i32
    %c0_i32_0 = arith.constant 0 : i32
    %c0_i32_1 = arith.constant 0 : i32
    return %c0_i32, %c0_i32_0 : i32, i32
  }
  func.func @transform_2(%arg0: i32) -> (i32, i32) {
    %c0_i32 = arith.constant 0 : i32
    %c0_i32_0 = arith.constant 0 : i32
    %c0_i32_1 = arith.constant 0 : i32
    return %c0_i32, %c0_i32_0 : i32, i32
  }
  func.func @transform_3(%arg0: i32) -> (i32, i32) {
    %c0_i32 = arith.constant 0 : i32
    %c0_i32_0 = arith.constant 0 : i32
    %c0_i32_1 = arith.constant 0 : i32
    return %c0_i32, %c0_i32_0 : i32, i32
  }
  func.func @transform_4(%arg0: i32) -> (i32, i32) {
    %c0_i32 = arith.constant 0 : i32
    %c0_i32_0 = arith.constant 0 : i32
    %c0_i32_1 = arith.constant 0 : i32
    return %c0_i32, %c0_i32_0 : i32, i32
  }
  func.func @transform_5(%arg0: i32) -> (i32, i32) {
    %c0_i32 = arith.constant 0 : i32
    %c0_i32_0 = arith.constant 0 : i32
    return %arg0, %c0_i32 : i32, i32
  }
}

</mosaic_0001>

<llo_original>
// kernel: tpu_custom_call.1
$region0: #{tpu_custom_call.1}
  #allocation0 [shape = 'u32[]', space=smem, size = 0x4, offset = 0x4, fixed_abs, tag = 'smem constant byte address 0x4 - core index']
  #allocation1 [shape = 'u32[144,128]{1,0:T(1,128)}', space=vmem, size = 0x12000, scoped, tag = 'internal scratch']
  %s0 = inlined_call_operand.vmem [shape: f32[4,250], index: 0, kind: input, shape index: {}]
  %s1 = inlined_call_operand.hbm [shape: bf16[250,256], index: 1, kind: input, shape index: {}]
  %s2 = inlined_call_operand.vmem [shape: f32[1,256], index: 2, kind: input, shape index: {}]
  %s3 = inlined_call_operand.vmem [shape: bf16[256,25], index: 3, kind: input, shape index: {}]
  %s4 = inlined_call_operand.vmem [shape: f32[1,25], index: 4, kind: input, shape index: {}]
  %s5 = inlined_call_operand.hbm [shape: f32[4,25], index: 5, kind: output, shape index: {}]
  %s6 = sld [smem:[#allocation0]]
  $region34: #{tpu_custom_call.1} parent=0
    _
  %s8 = ssub.s32 1, %s6
  %s9 = scalar_select 0, %s8, %s6
  $region1: #{tpu_custom_call.1} parent=0
    #allocation2 [shape = 'u8[131072]{0}', space=vmem, size = 0x20000, scoped, tag = 'input window, operand 1, single buffered']
    #allocation3 [shape = 's32[1]{0}', space=sflag, size = 0x4, scoped, tag = 'scoped memory for tpu_custom_call.1']
    #allocation4 [shape = 's32[1]{0}', space=sflag, size = 0x4, scoped, tag = 'scoped memory for tpu_custom_call.1']
    #allocation5 [shape = 'u8[4096]{0}', space=vmem, size = 0x1000, scoped, tag = 'output window, operand 0, single buffered']
    %10 = vsyncpa [#allocation3], 0
    %11 = vsyncpa [#allocation4], 0
    // Predicated region
    $region2: #{tpu_custom_call.1} parent=1 // pred_check
      _
    $region3: #{tpu_custom_call.1} parent=1 // pred_check_branch
      %13 = sbr.rel (0) target = $region5
    $region4: #{tpu_custom_call.1} parent=1 // pred_region
      _
    $region5: #{tpu_custom_call.1} parent=1 // pred_fallthru
      _
    // Predicated region
    $region6: #{tpu_custom_call.1} parent=1 // pred_check
      _
    $region7: #{tpu_custom_call.1} parent=1 // pred_check_branch
      %15 = sbr.rel (0) target = $region9
    $region8: #{tpu_custom_call.1} parent=1 // pred_region
      %s17 = ssub.s32 4096, 4096
      %18 = vsyncadd [#allocation3], %s17
      %s19 = sshll.u32 [#allocation2], 4
      %s20 = int_to_ptr.vmem [resolvable:$true] %s19
      %25 = dma.hbm_to_vmem [thread:$0]  %s1, 4096, %s20, [#allocation3], 128, 128, 8
    $region9: #{tpu_custom_call.1} parent=1 // pred_fallthru
      _
    // Predicated region
    $region10: #{tpu_custom_call.1} parent=1 // pred_check
      _
    $region11: #{tpu_custom_call.1} parent=1 // pred_check_branch
      %27 = sbr.rel (0) target = $region13
    $region12: #{tpu_custom_call.1} parent=1 // pred_region
      _
    $region13: #{tpu_custom_call.1} parent=1 // pred_fallthru
      _
    // Predicated region
    $region14: #{tpu_custom_call.1} parent=1 // pred_check
      _
    $region15: #{tpu_custom_call.1} parent=1 // pred_check_branch
      %29 = sbr.rel (0) target = $region17
    $region16: #{tpu_custom_call.1} parent=1 // pred_region
      _
    $region17: #{tpu_custom_call.1} parent=1 // pred_fallthru
      _
    // Predicated region
    $region18: #{tpu_custom_call.1} parent=1 // pred_check
      _
    $region19: #{tpu_custom_call.1} parent=1 // pred_check_branch
      %31 = sbr.rel (0) target = $region21
    $region20: #{tpu_custom_call.1} parent=1 // pred_region
      _
    $region21: #{tpu_custom_call.1} parent=1 // pred_fallthru
      _
    // Predicated region
    $region22: #{tpu_custom_call.1} parent=1 // pred_check
      _
    $region23: #{tpu_custom_call.1} parent=1 // pred_check_branch
      %33 = sbr.rel (0) target = $region25
    $region24: #{tpu_custom_call.1} parent=1 // pred_region
      %34 = dma.done [#allocation3], 4096
    $region25: #{tpu_custom_call.1} parent=1 // pred_fallthru
      _
    %v36 = vld [vmem:[%s0] sm:$0xff]
    %v37 = vld [vmem:[%s0 + $0x8] sm:$0xff]
    %v40 = vcombine.low %v36, %v37
    %v41 = vcombine.high %v36, %v37
    %v44 = vpack.c.bf16 %v40, %v40
    %v45 = vpack.c.bf16 %v41, %v41
    %v46 = vld [vmem:[#allocation2] sm:$0xff]
    %v47 = vld [vmem:[#allocation2 + $0x8] sm:$0xff]
    %v48 = vld [vmem:[#allocation2 + $0x10] sm:$0xff]
    %v49 = vld [vmem:[#allocation2 + $0x18] sm:$0xff]
    %v50 = vld [vmem:[#allocation2 + $0x20] sm:$0xff]
    %v51 = vld [vmem:[#allocation2 + $0x28] sm:$0xff]
    %v52 = vld [vmem:[#allocation2 + $0x30] sm:$0xff]
    %v53 = vld [vmem:[#allocation2 + $0x38] sm:$0xff]
    %v54 = vld [vmem:[#allocation2 + $0x40] sm:$0xff]
    %v55 = vld [vmem:[#allocation2 + $0x48] sm:$0xff]
    %v56 = vld [vmem:[#allocation2 + $0x50] sm:$0xff]
    %v57 = vld [vmem:[#allocation2 + $0x58] sm:$0xff]
    %v58 = vld [vmem:[#allocation2 + $0x60] sm:$0xff]
    %v59 = vld [vmem:[#allocation2 + $0x68] sm:$0xff]
    %v60 = vld [vmem:[#allocation2 + $0x70] sm:$0xff]
    %v61 = vld [vmem:[#allocation2 + $0x78] sm:$0xff]
    %v62 = vld [vmem:[#allocation2 + $0x80] sm:$0xff]
    %v63 = vld [vmem:[#allocation2 + $0x88] sm:$0xff]
    %v64 = vld [vmem:[#allocation2 + $0x90] sm:$0xff]
    %v65 = vld [vmem:[#allocation2 + $0x98] sm:$0xff]
    %v66 = vld [vmem:[#allocation2 + $0xa0] sm:$0xff]
    %v67 = vld [vmem:[#allocation2 + $0xa8] sm:$0xff]
    %v68 = vld [vmem:[#allocation2 + $0xb0] sm:$0xff]
    %v69 = vld [vmem:[#allocation2 + $0xb8] sm:$0xff]
    %v70 = vld [vmem:[#allocation2 + $0xc0] sm:$0xff]
    %v71 = vld [vmem:[#allocation2 + $0xc8] sm:$0xff]
    %v72 = vld [vmem:[#allocation2 + $0xd0] sm:$0xff]
    %v73 = vld [vmem:[#allocation2 + $0xd8] sm:$0xff]
    %v74 = vld [vmem:[#allocation2 + $0xe0] sm:$0xff]
    %v75 = vld [vmem:[#allocation2 + $0xe8] sm:$0xff]
    %v76 = vld [vmem:[#allocation2 + $0xf0] sm:$0xff]
    %v77 = vld [vmem:[#allocation2 + $0xf8] sm:$0x11]
    %v78 = vld [vmem:[%s2] sm:$0x3]
    %v80 = vlaneseq
    %v81 = vshrl.u32 %v80, 7
    %v82 = vsub.s32 0, %v81
    %v83 = vrot.slane %v78, %v82
    %v84 = vlaneseq
    %v85 = vshrl.u32 %v84, 7
    %v86 = vsub.s32 1, %v85
    %v87 = vrot.slane %v78, %v86
    %v122 = vunpack.c.l.b16 %v46
    %v123 = vunpack.c.h.b16 %v46
    %v124 = vunpack.c.l.b16 %v47
    %v125 = vunpack.c.h.b16 %v47
    %v126 = vunpack.c.l.b16 %v48
    %v127 = vunpack.c.h.b16 %v48
    %v128 = vunpack.c.l.b16 %v49
    %v129 = vunpack.c.h.b16 %v49
    %v130 = vunpack.c.l.b16 %v50
    %v131 = vunpack.c.h.b16 %v50
    %v132 = vunpack.c.l.b16 %v51
    %v133 = vunpack.c.h.b16 %v51
    %v134 = vunpack.c.l.b16 %v52
    %v135 = vunpack.c.h.b16 %v52
    %v136 = vunpack.c.l.b16 %v53
    %v137 = vunpack.c.h.b16 %v53
    %v138 = vunpack.c.l.b16 %v54
    %v139 = vunpack.c.h.b16 %v54
    %v140 = vunpack.c.l.b16 %v55
    %v141 = vunpack.c.h.b16 %v55
    %v142 = vunpack.c.l.b16 %v56
    %v143 = vunpack.c.h.b16 %v56
    %v144 = vunpack.c.l.b16 %v57
    %v145 = vunpack.c.h.b16 %v57
    %v146 = vunpack.c.l.b16 %v58
    %v147 = vunpack.c.h.b16 %v58
    %v148 = vunpack.c.l.b16 %v59
    %v149 = vunpack.c.h.b16 %v59
    %v150 = vunpack.c.l.b16 %v60
    %v151 = vunpack.c.h.b16 %v60
    %v152 = vunpack.c.l.b16 %v61
    %v153 = vunpack.c.h.b16 %v61
    %v154 = vunpack.c.l.b16 %v62
    %v155 = vunpack.c.h.b16 %v62
    %v156 = vunpack.c.l.b16 %v63
    %v157 = vunpack.c.h.b16 %v63
    %v158 = vunpack.c.l.b16 %v64
    %v159 = vunpack.c.h.b16 %v64
    %v160 = vunpack.c.l.b16 %v65
    %v161 = vunpack.c.h.b16 %v65
    %v162 = vunpack.c.l.b16 %v66
    %v163 = vunpack.c.h.b16 %v66
    %v164 = vunpack.c.l.b16 %v67
    %v165 = vunpack.c.h.b16 %v67
    %v166 = vunpack.c.l.b16 %v68
    %v167 = vunpack.c.h.b16 %v68
    %v168 = vunpack.c.l.b16 %v69
    %v169 = vunpack.c.h.b16 %v69
    %v170 = vunpack.c.l.b16 %v70
    %v171 = vunpack.c.h.b16 %v70
    %v172 = vunpack.c.l.b16 %v71
    %v173 = vunpack.c.h.b16 %v71
    %v174 = vunpack.c.l.b16 %v72
    %v175 = vunpack.c.h.b16 %v72
    %v176 = vunpack.c.l.b16 %v73
    %v177 = vunpack.c.h.b16 %v73
    %v178 = vunpack.c.l.b16 %v74
    %v179 = vunpack.c.h.b16 %v74
    %v180 = vunpack.c.l.b16 %v75
    %v181 = vunpack.c.h.b16 %v75
    %v182 = vunpack.c.l.b16 %v76
    %v183 = vunpack.c.h.b16 %v76
    %v184 = vunpack.c.l.b16 %v77
    %v185 = vunpack.c.h.b16 %v77
    %v186 = vpack.c.b16 %v124, %v122
    %v187 = vpack.c.b16 %v125, %v123
    %v188 = vpack.c.b16 %v128, %v126
    %v189 = vpack.c.b16 %v129, %v127
    %v190 = vpack.c.b16 %v132, %v130
    %v191 = vpack.c.b16 %v133, %v131
    %v192 = vpack.c.b16 %v136, %v134
    %v193 = vpack.c.b16 %v137, %v135
    %v194 = vpack.c.b16 %v140, %v138
    %v195 = vpack.c.b16 %v141, %v139
    %v196 = vpack.c.b16 %v144, %v142
    %v197 = vpack.c.b16 %v145, %v143
    %v198 = vpack.c.b16 %v148, %v146
    %v199 = vpack.c.b16 %v149, %v147
    %v200 = vpack.c.b16 %v152, %v150
    %v201 = vpack.c.b16 %v153, %v151
    %v202 = vpack.c.b16 %v156, %v154
    %v203 = vpack.c.b16 %v157, %v155
    %v204 = vpack.c.b16 %v160, %v158
    %v205 = vpack.c.b16 %v161, %v159
    %v206 = vpack.c.b16 %v164, %v162
    %v207 = vpack.c.b16 %v165, %v163
    %v208 = vpack.c.b16 %v168, %v166
    %v209 = vpack.c.b16 %v169, %v167
    %v210 = vpack.c.b16 %v172, %v170
    %v211 = vpack.c.b16 %v173, %v171
    %v212 = vpack.c.b16 %v176, %v174
    %v213 = vpack.c.b16 %v177, %v175
    %v214 = vpack.c.b16 %v180, %v178
    %v215 = vpack.c.b16 %v181, %v179
    %v216 = vpack.c.b16 %v184, %v182
    %v217 = vpack.c.b16 %v185, %v183
    %vm248 = vcmask 998400
    %v250 = vsel %vm248, %v45, 0
    %vm252 = vcmask 1044480
    %v254 = vsel %vm252, %v216, 0
    %v257 = vsel %vm252, %v217, 0
    %259 = vmatprep.subr.bf16.mxu0 %v187
    %260 = vmatpush1.bf16.msra.mxu0 %v186
    %261 = vmatprep.subr.bf16.mxu0 %v189
    %262 = vmatpush1.bf16.msra.mxu0 %v188
    %263 = vmatprep.subr.bf16.mxu0 %v191
    %264 = vmatpush1.bf16.msra.mxu0 %v190
    %265 = vmatprep.subr.bf16.mxu0 %v193
    %266 = vmatpush1.bf16.msra.mxu0 %v192
    %267 = vmatprep.subr.bf16.mxu0 %v195
    %268 = vmatpush1.bf16.msra.mxu0 %v194
    %269 = vmatprep.subr.bf16.mxu0 %v197
    %270 = vmatpush1.bf16.msra.mxu0 %v196
    %271 = vmatprep.subr.bf16.mxu0 %v199
    %272 = vmatpush1.bf16.msra.mxu0 %v198
    %273 = vmatprep.subr.bf16.mxu0 %v201
    %274 = vmatpush1.bf16.msra.mxu0 %v200
    %275 = vmatprep.subr.bf16.mxu0 %v203
    %276 = vmatpush1.bf16.msra.mxu0 %v202
    %277 = vmatprep.subr.bf16.mxu0 %v205
    %278 = vmatpush1.bf16.msra.mxu0 %v204
    %279 = vmatprep.subr.bf16.mxu0 %v207
    %280 = vmatpush1.bf16.msra.mxu0 %v206
    %281 = vmatprep.subr.bf16.mxu0 %v209
    %282 = vmatpush1.bf16.msra.mxu0 %v208
    %283 = vmatprep.subr.bf16.mxu0 %v211
    %284 = vmatpush1.bf16.msra.mxu0 %v210
    %285 = vmatprep.subr.bf16.mxu0 %v213
    %286 = vmatpush1.bf16.msra.mxu0 %v212
    %287 = vmatprep.subr.bf16.mxu0 %v215
    %288 = vmatpush1.bf16.msra.mxu0 %v214
    %289 = vmatprep.subr.bf16.mxu0 %v257
    %290 = vmatpush1.bf16.msra.mxu0 %v254
    %291 = vmatprep.mubr.bf16.mxu0 %v250
    %292 = vmatmul.mubr.bf16.gmra.mrb[0].mxu0 %v44
    %v293 = vpop.f32.mrb[0].mxu0
    %v294 = vadd.f32 %v83, %v293
    %v295 = vpop.f32.mrb[0].mxu0
    %v296 = vadd.f32 %v87, %v295
    %v297 = vpop.f32.mrb[0].mxu0
    %v298 = vpop.f32.mrb[0].mxu0
    %299 = vdwg.mxu0
    %v300 = vmax.f32 %v294, 0.0
    %v301 = vmax.f32 %v296, 0.0
    %v302 = vpack.c.bf16 %v300, %v300
    %v303 = vpack.c.bf16 %v301, %v301
    %v304 = vld [vmem:[%s3] sm:$0xf]
    %v305 = vld [vmem:[%s3 + $0x4] sm:$0xf]
    %v306 = vld [vmem:[%s3 + $0x8] sm:$0xf]
    %v307 = vld [vmem:[%s3 + $0xc] sm:$0xf]
    %v308 = vld [vmem:[%s3 + $0x10] sm:$0xf]
    %v309 = vld [vmem:[%s3 + $0x14] sm:$0xf]
    %v310 = vld [vmem:[%s3 + $0x18] sm:$0xf]
    %v311 = vld [vmem:[%s3 + $0x1c] sm:$0xf]
    %v312 = vld [vmem:[%s3 + $0x20] sm:$0xf]
    %v313 = vld [vmem:[%s3 + $0x24] sm:$0xf]
    %v314 = vld [vmem:[%s3 + $0x28] sm:$0xf]
    %v315 = vld [vmem:[%s3 + $0x2c] sm:$0xf]
    %v316 = vld [vmem:[%s3 + $0x30] sm:$0xf]
    %v317 = vld [vmem:[%s3 + $0x34] sm:$0xf]
    %v318 = vld [vmem:[%s3 + $0x38] sm:$0xf]
    %v319 = vld [vmem:[%s3 + $0x3c] sm:$0xf]
    %v320 = vld [vmem:[%s3 + $0x40] sm:$0xf]
    %v321 = vld [vmem:[%s3 + $0x44] sm:$0xf]
    %v322 = vld [vmem:[%s3 + $0x48] sm:$0xf]
    %v323 = vld [vmem:[%s3 + $0x4c] sm:$0xf]
    %v324 = vld [vmem:[%s3 + $0x50] sm:$0xf]
    %v325 = vld [vmem:[%s3 + $0x54] sm:$0xf]
    %v326 = vld [vmem:[%s3 + $0x58] sm:$0xf]
    %v327 = vld [vmem:[%s3 + $0x5c] sm:$0xf]
    %v328 = vld [vmem:[%s3 + $0x60] sm:$0xf]
    %v329 = vld [vmem:[%s3 + $0x64] sm:$0xf]
    %v330 = vld [vmem:[%s3 + $0x68] sm:$0xf]
    %v331 = vld [vmem:[%s3 + $0x6c] sm:$0xf]
    %v332 = vld [vmem:[%s3 + $0x70] sm:$0xf]
    %v333 = vld [vmem:[%s3 + $0x74] sm:$0xf]
    %v334 = vld [vmem:[%s3 + $0x78] sm:$0xf]
    %v335 = vld [vmem:[%s3 + $0x7c] sm:$0xf]
    %v336 = vld [vmem:[%s4] sm:$0x1]
    %v338 = vlaneseq
    %v339 = vshrl.u32 %v338, 7
    %v340 = vsub.s32 0, %v339
    %v341 = vrot.slane %v336, %v340
    %v375 = vunpack.c.l.b16 %v304
    %v376 = vunpack.c.l.b16 %v305
    %v377 = vunpack.c.l.b16 %v306
    %v378 = vunpack.c.l.b16 %v307
    %v379 = vunpack.c.l.b16 %v308
    %v380 = vunpack.c.l.b16 %v309
    %v381 = vunpack.c.l.b16 %v310
    %v382 = vunpack.c.l.b16 %v311
    %v383 = vunpack.c.l.b16 %v312
    %v384 = vunpack.c.l.b16 %v313
    %v385 = vunpack.c.l.b16 %v314
    %v386 = vunpack.c.l.b16 %v315
    %v387 = vunpack.c.l.b16 %v316
    %v388 = vunpack.c.l.b16 %v317
    %v389 = vunpack.c.l.b16 %v318
    %v390 = vunpack.c.l.b16 %v319
    %v391 = vunpack.c.l.b16 %v320
    %v392 = vunpack.c.l.b16 %v321
    %v393 = vunpack.c.l.b16 %v322
    %v394 = vunpack.c.l.b16 %v323
    %v395 = vunpack.c.l.b16 %v324
    %v396 = vunpack.c.l.b16 %v325
    %v397 = vunpack.c.l.b16 %v326
    %v398 = vunpack.c.l.b16 %v327
    %v399 = vunpack.c.l.b16 %v328
    %v400 = vunpack.c.l.b16 %v329
    %v401 = vunpack.c.l.b16 %v330
    %v402 = vunpack.c.l.b16 %v331
    %v403 = vunpack.c.l.b16 %v332
    %v404 = vunpack.c.l.b16 %v333
    %v405 = vunpack.c.l.b16 %v334
    %v406 = vunpack.c.l.b16 %v335
    %v407 = vpack.c.b16 %v376, %v375
    %v408 = vpack.c.b16 %v378, %v377
    %v409 = vpack.c.b16 %v380, %v379
    %v410 = vpack.c.b16 %v382, %v381
    %v411 = vpack.c.b16 %v384, %v383
    %v412 = vpack.c.b16 %v386, %v385
    %v413 = vpack.c.b16 %v388, %v387
    %v414 = vpack.c.b16 %v390, %v389
    %v415 = vpack.c.b16 %v392, %v391
    %v416 = vpack.c.b16 %v394, %v393
    %v417 = vpack.c.b16 %v396, %v395
    %v418 = vpack.c.b16 %v398, %v397
    %v419 = vpack.c.b16 %v400, %v399
    %v420 = vpack.c.b16 %v402, %v401
    %v421 = vpack.c.b16 %v404, %v403
    %v422 = vpack.c.b16 %v406, %v405
    %439 = vmatprep.subr.bf16.mxu0 0
    %440 = vmatpush1.bf16.msra.mxu0 %v407
    %441 = vmatprep.subr.bf16.mxu0 0
    %442 = vmatpush1.bf16.msra.mxu0 %v408
    %443 = vmatprep.subr.bf16.mxu0 0
    %444 = vmatpush1.bf16.msra.mxu0 %v409
    %445 = vmatprep.subr.bf16.mxu0 0
    %446 = vmatpush1.bf16.msra.mxu0 %v410
    %447 = vmatprep.subr.bf16.mxu0 0
    %448 = vmatpush1.bf16.msra.mxu0 %v411
    %449 = vmatprep.subr.bf16.mxu0 0
    %450 = vmatpush1.bf16.msra.mxu0 %v412
    %451 = vmatprep.subr.bf16.mxu0 0
    %452 = vmatpush1.bf16.msra.mxu0 %v413
    %453 = vmatprep.subr.bf16.mxu0 0
    %454 = vmatpush1.bf16.msra.mxu0 %v414
    %455 = vmatprep.subr.bf16.mxu0 0
    %456 = vmatpush1.bf16.msra.mxu0 %v415
    %457 = vmatprep.subr.bf16.mxu0 0
    %458 = vmatpush1.bf16.msra.mxu0 %v416
    %459 = vmatprep.subr.bf16.mxu0 0
    %460 = vmatpush1.bf16.msra.mxu0 %v417
    %461 = vmatprep.subr.bf16.mxu0 0
    %462 = vmatpush1.bf16.msra.mxu0 %v418
    %463 = vmatprep.subr.bf16.mxu0 0
    %464 = vmatpush1.bf16.msra.mxu0 %v419
    %465 = vmatprep.subr.bf16.mxu0 0
    %466 = vmatpush1.bf16.msra.mxu0 %v420
    %467 = vmatprep.subr.bf16.mxu0 0
    %468 = vmatpush1.bf16.msra.mxu0 %v421
    %469 = vmatprep.subr.bf16.mxu0 0
    %470 = vmatpush1.bf16.msra.mxu0 %v422
    %471 = vmatprep.mubr.bf16.mxu0 %v303
    %472 = vmatmul.mubr.bf16.gmra.mrb[0].mxu0 %v302
    %v473 = vpop.f32.mrb[0].mxu0
    %v474 = vadd.f32 %v341, %v473
    %v475 = vpop.f32.mrb[0].mxu0
    %v476 = vpop.f32.mrb[0].mxu0
    %v477 = vpop.f32.mrb[0].mxu0
    %478 = vdwg.mxu0
    %vm479 = vcmask 203776
    %480 = vst.msk [vmem:[#allocation5] sm:$0xff] %vm479, %v474
    // Predicated region
    $region26: #{tpu_custom_call.1} parent=1 // pred_check
      _
    $region27: #{tpu_custom_call.1} parent=1 // pred_check_branch
      %482 = sbr.rel (0) target = $region29
    $region28: #{tpu_custom_call.1} parent=1 // pred_region
      %s484 = ssub.s32 128, 64
      %485 = vsyncadd [#allocation4], %s484
      %s486 = sshll.u32 [#allocation5], 4
      %s487 = int_to_ptr.vmem [resolvable:$true] %s486
      %492 = dma.vmem_to_hbm [thread:$0]  %s487, 64, %s5, [#allocation4], 64, 64, 4
    $region29: #{tpu_custom_call.1} parent=1 // pred_fallthru
      _
    // Predicated region
    $region30: #{tpu_custom_call.1} parent=1 // pred_check
      _
    $region31: #{tpu_custom_call.1} parent=1 // pred_check_branch
      %494 = sbr.rel (0) target = $region33
    $region32: #{tpu_custom_call.1} parent=1 // pred_region
      %495 = dma.done [#allocation4], 128
    $region33: #{tpu_custom_call.1} parent=1 // pred_fallthru
      _
    %496 = vsyncpa [#allocation3], 1
    %497 = vsyncpa [#allocation4], 1

</llo_original>
